<compile_context>
chip_gen: v5e
topology: v5e:2x2
jax: 0.10.0
libtpu: 0.0.40
codegen_flags: <defaults>
</compile_context>

<pallas_src>
import jax
import jax.numpy as jnp
from jax.experimental import pallas as pl
from jax.experimental.pallas import tpu as pltpu


def lr_kernel(x_ref, w1_ref, b1_ref, w2_ref, b2_ref, w3_ref, b3_ref, o_ref):
    # x tile: (TN, D) f32 in VMEM -> bf16 only for the MXU operands.
    x = x_ref[...].astype(jnp.bfloat16)

    # Layer 1 (transposed chain): h1 = relu(W1 @ x^T + b1) -> (80, TN).
    # NT matmul contracting the last (feature) axis of both operands — the
    # Q.K^T pattern the MXU handles without an explicit relayout of x.
    h1 = jax.lax.dot_general(
        w1_ref[...], x,
        dimension_numbers=(((1,), (1,)), ((), ())),
        preferred_element_type=jnp.float32)
    h1 = jnp.maximum(h1 + b1_ref[...], 0.0)
    # dropout -> identity (eval mode)

    # Layer 2: h2 = relu(W2 @ h1 + b2) -> (10, TN). Canonical (M,K)x(K,N).
    h2 = jnp.dot(w2_ref[...], h1.astype(jnp.bfloat16),
                 preferred_element_type=jnp.float32)
    h2 = jnp.maximum(h2 + b2_ref[...], 0.0)
    # dropout -> identity (eval mode)

    # Layer 3 (10 -> 1): VPU multiply + sublane reduce; stays off the MXU.
    out = jnp.sum(h2 * w3_ref[...], axis=0, keepdims=True) + b3_ref[0, 0]
    o_ref[...] = out.astype(o_ref.dtype)   # lane-dense (1, TN) unmasked store


def _choose_tile_n(n, cap=4096):
    """tile_n = min(cap, round_up(n, 128)); prefer >= 2 grid steps when there
    is enough work so v7x can shard the 'parallel' axis across its 2 TCs."""
    rounded = pl.cdiv(n, 128) * 128
    tile_n = min(cap, rounded)
    if tile_n == rounded and rounded >= 512:
        tile_n = pl.cdiv(rounded // 2, 128) * 128
    return tile_n


def lr_forward(x, params, *, tile_n=None):
    """x: (N, dim) f32 -> (N,) f32; matches LR.forward eval-mode semantics."""
    w1, b1, w2, b2, w3, b3 = params        # PyTorch layout: w (out, in), b (out,)
    N, D = x.shape
    if tile_n is None:
        tile_n = _choose_tile_n(N)
    assert tile_n % 128 == 0, "tile_n must be a multiple of 128 (lane-dense output)"

    num_tiles = pl.cdiv(N, tile_n)
    n_out = num_tiles * tile_n  # only the tiny output is padded; x is NOT padded

    # Weight prep (tiny, once per call; negligible next to the x read).
    # TODO(synk): b1/b2/w3 could be packed into one (·,1) operand if the bundle
    # dump ever shows DMA-descriptor pressure at step boundaries.
    w1b = w1.astype(jnp.bfloat16)                  # (80, D)
    w2b = w2.astype(jnp.bfloat16)                  # (10, 80)
    b1c = b1.reshape(-1, 1).astype(jnp.float32)    # (80, 1)
    b2c = b2.reshape(-1, 1).astype(jnp.float32)    # (10, 1)
    w3c = w3.reshape(-1, 1).astype(jnp.float32)    # (10, 1)  (PyTorch stores (1, 10))
    b3s = b3.reshape(1, 1).astype(jnp.float32)     # (1, 1) SMEM scalar

    out = pl.pallas_call(
        lr_kernel,
        out_shape=jax.ShapeDtypeStruct((1, n_out), jnp.float32),
        grid_spec=pltpu.PrefetchScalarGridSpec(
            num_scalar_prefetch=0,
            grid=(num_tiles,),
            in_specs=[
                pl.BlockSpec((tile_n, D), lambda i: (i, 0)),        # x row-tile (last one ragged)
                pl.BlockSpec((80, D), lambda i: (0, 0)),            # W1 (bf16)
                pl.BlockSpec((80, 1), lambda i: (0, 0)),            # b1 column
                pl.BlockSpec((10, 80), lambda i: (0, 0)),           # W2 (bf16)
                pl.BlockSpec((10, 1), lambda i: (0, 0)),            # b2 column
                pl.BlockSpec((10, 1), lambda i: (0, 0)),            # w3 column
                pl.BlockSpec(memory_space=pltpu.MemorySpace.SMEM),  # b3 scalar
            ],
            out_specs=pl.BlockSpec((1, tile_n), lambda i: (0, i)),  # lane-dense row
        ),
        compiler_params=pltpu.CompilerParams(
            dimension_semantics=("parallel",),
        ),
    )(x, w1b, b1c, w2b, b2c, w3c, b3s)
    return out[0, :N]  # .squeeze(dim=1); padded / garbage columns stripped


def init_lr_params(key, dim):
    """Deterministic init mirroring torch.nn.Linear default (U[-1/sqrt(fan_in), +]),
    stored in PyTorch layout: weight (out, in), bias (out,)."""
    def linear(k, fan_in, fan_out):
        kw, kb = jax.random.split(k)
        bound = 1.0 / jnp.sqrt(jnp.float32(fan_in))
        w = jax.random.uniform(kw, (fan_out, fan_in), jnp.float32, -bound, bound)
        b = jax.random.uniform(kb, (fan_out,), jnp.float32, -bound, bound)
        return w, b

    k1, k2, k3 = jax.random.split(key, 3)
    w1, b1 = linear(k1, dim, 80)
    w2, b2 = linear(k2, 80, 10)
    w3, b3 = linear(k3, 10, 1)
    return (w1, b1, w2, b2, w3, b3)


if __name__ == "__main__":
    key = jax.random.PRNGKey(0)
    k_param, k_x = jax.random.split(key)

    # Small shapes: dim=32 features, N=700 rows.  With the adaptive tile
    # policy this gives tile_n=384 and a 2-step grid whose last x block is
    # ragged (rows 384..699 valid, 700..767 garbage and discarded).
    N, dim = 700, 32
    params = init_lr_params(k_param, dim)
    x = jax.random.normal(k_x, (N, dim), jnp.float32)

    out = jax.block_until_ready(lr_forward(x, params))

    # Pure-JAX reference on the same precision path (bf16 matmul inputs,
    # f32 accumulation), eval-mode dropout = identity.
    w1, b1, w2, b2, w3, b3 = params
    xb = x.astype(jnp.bfloat16)
    h1 = jnp.maximum(
        jnp.dot(xb, w1.astype(jnp.bfloat16).T,
                preferred_element_type=jnp.float32) + b1, 0.0)
    h2 = jnp.maximum(
        jnp.dot(h1.astype(jnp.bfloat16), w2.astype(jnp.bfloat16).T,
                preferred_element_type=jnp.float32) + b2, 0.0)
    ref = jnp.sum(h2 * w3[0], axis=1) + b3[0]   # f32 multiply + reduce, like the kernel

    assert out.shape == (N,)
    assert jnp.allclose(out, ref, atol=5e-3, rtol=5e-3), \
        float(jnp.max(jnp.abs(out - ref)))

    print("KERNEL_OK")
</pallas_src>

<mosaic_0001>
module attributes {stable_mosaic.version = 11 : i64} {
  func.func @lr_kernel(%arg0: i32, %arg1: memref<384x32xf32, #tpu.memory_space<vmem>>, %arg2: memref<80x32xbf16, #tpu.memory_space<vmem>>, %arg3: memref<80x1xf32, #tpu.memory_space<vmem>>, %arg4: memref<10x80xbf16, #tpu.memory_space<vmem>>, %arg5: memref<10x1xf32, #tpu.memory_space<vmem>>, %arg6: memref<10x1xf32, #tpu.memory_space<vmem>>, %arg7: memref<1x1xf32, #tpu.memory_space<smem>>, %arg8: memref<1x384xf32, #tpu.memory_space<vmem>>) attributes {dimension_semantics = [#tpu.dimension_semantics<parallel>], iteration_bounds = array<i64: 2>, scalar_prefetch = 0 : i64, scratch_operands = 0 : i64, tpu.core_type = #tpu.core_type<tc>, window_params = [{transform_indices = @transform_0, window_bounds = array<i64: 384, 32>}, {pipeline_mode = #tpu.pipeline_mode<synchronous>, transform_indices = @transform_1, window_bounds = array<i64: 80, 32>}, {pipeline_mode = #tpu.pipeline_mode<synchronous>, transform_indices = @transform_2, window_bounds = array<i64: 80, 1>}, {pipeline_mode = #tpu.pipeline_mode<synchronous>, transform_indices = @transform_3, window_bounds = array<i64: 10, 80>}, {pipeline_mode = #tpu.pipeline_mode<synchronous>, transform_indices = @transform_4, window_bounds = array<i64: 10, 1>}, {pipeline_mode = #tpu.pipeline_mode<synchronous>, transform_indices = @transform_5, window_bounds = array<i64: 10, 1>}, {transform_indices = @transform_6, window_bounds = array<i64: 1, 1>}, {transform_indices = @transform_7, window_bounds = array<i64: 1, 384>}]} {
    %c0 = arith.constant 0 : index
    %c0_0 = arith.constant 0 : index
    %0 = vector.load %arg1[%c0, %c0_0] : memref<384x32xf32, #tpu.memory_space<vmem>>, vector<384x32xf32>
    %1 = arith.truncf %0 : vector<384x32xf32> to vector<384x32xbf16>
    %c0_1 = arith.constant 0 : index
    %c0_2 = arith.constant 0 : index
    %2 = vector.load %arg2[%c0_1, %c0_2] : memref<80x32xbf16, #tpu.memory_space<vmem>>, vector<80x32xbf16>
    %cst = arith.constant dense<0.000000e+00> : vector<80x384xf32>
    %3 = tpu.matmul %2, %1, %cst {dimension_numbers = #tpu.dot_dimension_numbers<[1], [1], [0], [0], [0, 0, 1, 0], [], []>} : vector<80x32xbf16>, vector<384x32xbf16>, vector<80x384xf32> -> vector<80x384xf32>
    %c0_3 = arith.constant 0 : index
    %c0_4 = arith.constant 0 : index
    %4 = vector.load %arg3[%c0_3, %c0_4] : memref<80x1xf32, #tpu.memory_space<vmem>>, vector<80x1xf32>
    %5 = vector.broadcast %4 : vector<80x1xf32> to vector<80x384xf32>
    %6 = arith.addf %3, %5 : vector<80x384xf32>
    %cst_5 = arith.constant 0.000000e+00 : f32
    %7 = vector.broadcast %cst_5 : f32 to vector<80x384xf32>
    %8 = arith.maximumf %6, %7 : vector<80x384xf32>
    %c0_6 = arith.constant 0 : index
    %c0_7 = arith.constant 0 : index
    %9 = vector.load %arg4[%c0_6, %c0_7] : memref<10x80xbf16, #tpu.memory_space<vmem>>, vector<10x80xbf16>
    %10 = arith.truncf %8 : vector<80x384xf32> to vector<80x384xbf16>
    %cst_8 = arith.constant dense<0.000000e+00> : vector<10x384xf32>
    %11 = tpu.matmul %9, %10, %cst_8 {dimension_numbers = #tpu.dot_dimension_numbers<[1], [0], [0], [1], [0, 0, 1, 1], [], []>} : vector<10x80xbf16>, vector<80x384xbf16>, vector<10x384xf32> -> vector<10x384xf32>
    %c0_9 = arith.constant 0 : index
    %c0_10 = arith.constant 0 : index
    %12 = vector.load %arg5[%c0_9, %c0_10] : memref<10x1xf32, #tpu.memory_space<vmem>>, vector<10x1xf32>
    %13 = vector.broadcast %12 : vector<10x1xf32> to vector<10x384xf32>
    %14 = arith.addf %11, %13 : vector<10x384xf32>
    %cst_11 = arith.constant 0.000000e+00 : f32
    %15 = vector.broadcast %cst_11 : f32 to vector<10x384xf32>
    %16 = arith.maximumf %14, %15 : vector<10x384xf32>
    %c0_12 = arith.constant 0 : index
    %c0_13 = arith.constant 0 : index
    %17 = vector.load %arg6[%c0_12, %c0_13] : memref<10x1xf32, #tpu.memory_space<vmem>>, vector<10x1xf32>
    %18 = vector.broadcast %17 : vector<10x1xf32> to vector<10x384xf32>
    %19 = arith.mulf %16, %18 : vector<10x384xf32>
    %cst_14 = arith.constant dense<0.000000e+00> : vector<384xf32>
    %20 = vector.multi_reduction <add>, %19, %cst_14 [0] : vector<10x384xf32> to vector<384xf32>
    %21 = vector.shape_cast %20 : vector<384xf32> to vector<1x384xf32>
    %c0_15 = arith.constant 0 : index
    %c0_16 = arith.constant 0 : index
    %22 = memref.load %arg7[%c0_15, %c0_16] : memref<1x1xf32, #tpu.memory_space<smem>>
    %23 = vector.broadcast %22 : f32 to vector<1x384xf32>
    %24 = arith.addf %21, %23 : vector<1x384xf32>
    %c0_17 = arith.constant 0 : index
    %c0_18 = arith.constant 0 : index
    %25 = vector.load %arg8[%c0_17, %c0_18] : memref<1x384xf32, #tpu.memory_space<vmem>>, vector<1x384xf32>
    tpu.vector_store %arg8[%c0_17, %c0_18], %24 {strides = array<i32>} : memref<1x384xf32, #tpu.memory_space<vmem>>, vector<1x384xf32>,
    return
  }
  func.func @transform_0(%arg0: i32) -> (i32, i32) {
    %c0_i32 = arith.constant 0 : i32
    %c0_i32_0 = arith.constant 0 : i32
    return %arg0, %c0_i32 : i32, i32
  }
  func.func @transform_1(%arg0: i32) -> (i32, i32) {
    %c0_i32 = arith.constant 0 : i32
    %c0_i32_0 = arith.constant 0 : i32
    %c0_i32_1 = arith.constant 0 : i32
    return %c0_i32, %c0_i32_0 : i32, i32
  }
  func.func @transform_2(%arg0: i32) -> (i32, i32) {
    %c0_i32 = arith.constant 0 : i32
    %c0_i32_0 = arith.constant 0 : i32
    %c0_i32_1 = arith.constant 0 : i32
    return %c0_i32, %c0_i32_0 : i32, i32
  }
  func.func @transform_3(%arg0: i32) -> (i32, i32) {
    %c0_i32 = arith.constant 0 : i32
    %c0_i32_0 = arith.constant 0 : i32
    %c0_i32_1 = arith.constant 0 : i32
    return %c0_i32, %c0_i32_0 : i32, i32
  }
  func.func @transform_4(%arg0: i32) -> (i32, i32) {
    %c0_i32 = arith.constant 0 : i32
    %c0_i32_0 = arith.constant 0 : i32
    %c0_i32_1 = arith.constant 0 : i32
    return %c0_i32, %c0_i32_0 : i32, i32
  }
  func.func @transform_5(%arg0: i32) -> (i32, i32) {
    %c0_i32 = arith.constant 0 : i32
    %c0_i32_0 = arith.constant 0 : i32
    %c0_i32_1 = arith.constant 0 : i32
    return %c0_i32, %c0_i32_0 : i32, i32
  }
  func.func @transform_6(%arg0: i32) -> (i32, i32) {
    %c0_i32 = arith.constant 0 : i32
    %c0_i32_0 = arith.constant 0 : i32
    %c0_i32_1 = arith.constant 0 : i32
    return %c0_i32, %c0_i32_0 : i32, i32
  }
  func.func @transform_7(%arg0: i32) -> (i32, i32) {
    %c0_i32 = arith.constant 0 : i32
    %c0_i32_0 = arith.constant 0 : i32
    return %c0_i32, %arg0 : i32, i32
  }
}

</mosaic_0001>

<llo_original>
// kernel: tpu_custom_call.1
$region0: #{tpu_custom_call.1}
  #allocation0 [shape = 'u32[]', space=smem, size = 0x4, offset = 0x4, fixed_abs, tag = 'smem constant byte address 0x4 - core index']
  #allocation1 [shape = 'u32[72,128]{1,0:T(1,128)}', space=vmem, size = 0x9000, scoped, tag = 'internal scratch']
  #allocation2 [shape = 'f32[1,1]{1,0:T(1,128)S(6)}', space=smem, size = 0x200, scoped, tag = 'scoped memory for tpu_custom_call.1']
  %s0 = inlined_call_operand.vmem [shape: f32[700,32], index: 0, kind: input, shape index: {}]
  %s1 = inlined_call_operand.vmem [shape: bf16[80,32], index: 1, kind: input, shape index: {}]
  %s2 = inlined_call_operand.vmem [shape: f32[80,1], index: 2, kind: input, shape index: {}]
  %s3 = inlined_call_operand.vmem [shape: bf16[10,80], index: 3, kind: input, shape index: {}]
  %s4 = inlined_call_operand.vmem [shape: f32[10,1], index: 4, kind: input, shape index: {}]
  %s5 = inlined_call_operand.vmem [shape: f32[10,1], index: 5, kind: input, shape index: {}]
  %s6 = inlined_call_operand.<no memory space> [shape: f32[1,1], index: 6, kind: input, shape index: {}]
  %s7 = inlined_call_operand.hbm [shape: f32[1,768], index: 7, kind: output, shape index: {}]
  %s8 = sld [smem:[#allocation0]]
  $region61: #{tpu_custom_call.1} parent=0
    _
  %s10 = ssub.s32 1, %s8
  %s11 = scalar_select 0, %s10, %s8
  %12 = sst [smem:[#allocation2]] %s6
  $region1: #{tpu_custom_call.1} parent=0
    #allocation3 [shape = 'u8[3072]{0}', space=vmem, size = 0xc00, scoped, tag = 'output window, operand 0']
    #allocation4 [shape = 's32[2]{0}', space=sflag, size = 0x8, scoped, tag = 'scoped memory for tpu_custom_call.1']
    %13 = vsyncpa [#allocation4], 0
    %s14 = scalar_lea.sflag [#allocation4], 1
    %15 = vsyncpa %s14, 0
    loop: start=0, step=1, limit=4
    $region2: #{tpu_custom_call.1} parent=1 // loop_pre_header
      _
    $region3: #{tpu_custom_call.1} parent=1 // loop_header
      %s17 = sphi 0, %s21
      %p18 = scmp.ge.s32.totalorder %s17, 4
      %s27 = sphi 0, %s29
      %s30 = sphi 0, %s27
      %s31 = sphi 0, %s30
      %s47 = sphi 0, %s31
      %s51 = sphi 0, %s51
      %s53 = sphi 0, %s51
      %s54 = sphi 0, %s53
      %s68 = sphi 0, %s54
      %s72 = sphi 0, %s72
      %s74 = sphi 0, %s72
      %s75 = sphi 0, %s74
      %s89 = sphi 0, %s75
      %s93 = sphi 0, %s93
      %s95 = sphi 0, %s93
      %s96 = sphi 0, %s95
      %s110 = sphi 0, %s96
      %s114 = sphi 0, %s114
      %s116 = sphi 0, %s114
      %s117 = sphi 0, %s116
      %s131 = sphi 0, %s117
      %s135 = sphi 0, %s135
      %s137 = sphi 0, %s135
      %s138 = sphi 0, %s137
      %s152 = sphi 0, %s138
      %s156 = sphi 0, %s156
      %s158 = sphi 0, %s156
      %s159 = sphi 0, %s158
      %s173 = sphi 0, %s159
      %s179 = sphi 0, %s181
      %s182 = sphi 0, %s179
      %s183 = sphi 0, %s182
      %s199 = sphi 0, %s183
    $region4: #{tpu_custom_call.1} parent=1 // loop_header_branch
      %20 = sbr.rel (%p18) target = $region8
    $region5: #{tpu_custom_call.1} parent=1 // loop_body
      %s22 = ssub.s32 %s17, 1
      %s23 = ssub.s32 %s17, 2
      %s24 = sadd.s32 %s17, 1
      %s25 = ssub.s32 %s17, %s24
      %p26 = scmp.eq.s32.totalorder %s25, 0
      %s28 = sadd.s32 %s27, 1
      %s29 = scalar_select %p26, %s27, %s28
      %p32 = pneg %p26
      %p33 = scmp.eq.s32.totalorder %s17, 1
      %p34 = por %p32, %p33
      %p35 = scmp.ne.s32.totalorder %s27, %s30
      %p36 = scmp.eq.s32.totalorder %s17, 0
      %p37 = por %p35, %p36
      %p38 = scmp.ne.s32.totalorder %s27, %s30
      %p39 = scmp.eq.s32.totalorder %s22, 1
      %p40 = por %p38, %p39
      %p41 = scmp.ne.s32.totalorder %s30, %s31
      %p42 = scmp.eq.s32.totalorder %s22, 0
      %p43 = por %p41, %p42
      %p44 = scmp.ne.s32.totalorder %s30, %s31
      %p45 = scmp.eq.s32.totalorder %s23, 1
      %p46 = por %p44, %p45
      %p48 = scmp.ne.s32.totalorder %s31, %s47
      %p49 = scmp.eq.s32.totalorder %s23, 0
      %p50 = por %p48, %p49
      %s52 = sadd.s32 %s51, 1
      %p55 = scmp.eq.s32.totalorder %s17, 1
      %p56 = scmp.ne.s32.totalorder %s51, %s53
      %p57 = scmp.eq.s32.totalorder %s17, 0
      %p58 = por %p56, %p57
      %p59 = scmp.ne.s32.totalorder %s51, %s53
      %p60 = scmp.eq.s32.totalorder %s22, 1
      %p61 = por %p59, %p60
      %p62 = scmp.ne.s32.totalorder %s53, %s54
      %p63 = scmp.eq.s32.totalorder %s22, 0
      %p64 = por %p62, %p63
      %p65 = scmp.ne.s32.totalorder %s53, %s54
      %p66 = scmp.eq.s32.totalorder %s23, 1
      %p67 = por %p65, %p66
      %p69 = scmp.ne.s32.totalorder %s54, %s68
      %p70 = scmp.eq.s32.totalorder %s23, 0
      %p71 = por %p69, %p70
      %s73 = sadd.s32 %s72, 1
      %p76 = scmp.eq.s32.totalorder %s17, 1
      %p77 = scmp.ne.s32.totalorder %s72, %s74
      %p78 = scmp.eq.s32.totalorder %s17, 0
      %p79 = por %p77, %p78
      %p80 = scmp.ne.s32.totalorder %s72, %s74
      %p81 = scmp.eq.s32.totalorder %s22, 1
      %p82 = por %p80, %p81
      %p83 = scmp.ne.s32.totalorder %s74, %s75
      %p84 = scmp.eq.s32.totalorder %s22, 0
      %p85 = por %p83, %p84
      %p86 = scmp.ne.s32.totalorder %s74, %s75
      %p87 = scmp.eq.s32.totalorder %s23, 1
      %p88 = por %p86, %p87
      %p90 = scmp.ne.s32.totalorder %s75, %s89
      %p91 = scmp.eq.s32.totalorder %s23, 0
      %p92 = por %p90, %p91
      %s94 = sadd.s32 %s93, 1
      %p97 = scmp.eq.s32.totalorder %s17, 1
      %p98 = scmp.ne.s32.totalorder %s93, %s95
      %p99 = scmp.eq.s32.totalorder %s17, 0
      %p100 = por %p98, %p99
      %p101 = scmp.ne.s32.totalorder %s93, %s95
      %p102 = scmp.eq.s32.totalorder %s22, 1
      %p103 = por %p101, %p102
      %p104 = scmp.ne.s32.totalorder %s95, %s96
      %p105 = scmp.eq.s32.totalorder %s22, 0
      %p106 = por %p104, %p105
      %p107 = scmp.ne.s32.totalorder %s95, %s96
      %p108 = scmp.eq.s32.totalorder %s23, 1
      %p109 = por %p107, %p108
      %p111 = scmp.ne.s32.totalorder %s96, %s110
      %p112 = scmp.eq.s32.totalorder %s23, 0
      %p113 = por %p111, %p112
      %s115 = sadd.s32 %s114, 1
      %p118 = scmp.eq.s32.totalorder %s17, 1
      %p119 = scmp.ne.s32.totalorder %s114, %s116
      %p120 = scmp.eq.s32.totalorder %s17, 0
      %p121 = por %p119, %p120
      %p122 = scmp.ne.s32.totalorder %s114, %s116
      %p123 = scmp.eq.s32.totalorder %s22, 1
      %p124 = por %p122, %p123
      %p125 = scmp.ne.s32.totalorder %s116, %s117
      %p126 = scmp.eq.s32.totalorder %s22, 0
      %p127 = por %p125, %p126
      %p128 = scmp.ne.s32.totalorder %s116, %s117
      %p129 = scmp.eq.s32.totalorder %s23, 1
      %p130 = por %p128, %p129
      %p132 = scmp.ne.s32.totalorder %s117, %s131
      %p133 = scmp.eq.s32.totalorder %s23, 0
      %p134 = por %p132, %p133
      %s136 = sadd.s32 %s135, 1
      %p139 = scmp.eq.s32.totalorder %s17, 1
      %p140 = scmp.ne.s32.totalorder %s135, %s137
      %p141 = scmp.eq.s32.totalorder %s17, 0
      %p142 = por %p140, %p141
      %p143 = scmp.ne.s32.totalorder %s135, %s137
      %p144 = scmp.eq.s32.totalorder %s22, 1
      %p145 = por %p143, %p144
      %p146 = scmp.ne.s32.totalorder %s137, %s138
      %p147 = scmp.eq.s32.totalorder %s22, 0
      %p148 = por %p146, %p147
      %p149 = scmp.ne.s32.totalorder %s137, %s138
      %p150 = scmp.eq.s32.totalorder %s23, 1
      %p151 = por %p149, %p150
      %p153 = scmp.ne.s32.totalorder %s138, %s152
      %p154 = scmp.eq.s32.totalorder %s23, 0
      %p155 = por %p153, %p154
      %s157 = sadd.s32 %s156, 1
      %p160 = scmp.eq.s32.totalorder %s17, 1
      %p161 = scmp.ne.s32.totalorder %s156, %s158
      %p162 = scmp.eq.s32.totalorder %s17, 0
      %p163 = por %p161, %p162
      %p164 = scmp.ne.s32.totalorder %s156, %s158
      %p165 = scmp.eq.s32.totalorder %s22, 1
      %p166 = por %p164, %p165
      %p167 = scmp.ne.s32.totalorder %s158, %s159
      %p168 = scmp.eq.s32.totalorder %s22, 0
      %p169 = por %p167, %p168
      %p170 = scmp.ne.s32.totalorder %s158, %s159
      %p171 = scmp.eq.s32.totalorder %s23, 1
      %p172 = por %p170, %p171
      %p174 = scmp.ne.s32.totalorder %s159, %s173
      %p175 = scmp.eq.s32.totalorder %s23, 0
      %p176 = por %p174, %p175
      %s177 = ssub.s32 %s17, %s24
      %p178 = scmp.eq.s32.totalorder %s177, 0
      %s180 = sadd.s32 %s179, 1
      %s181 = scalar_select %p178, %s179, %s180
      %p184 = pneg %p178
      %p185 = scmp.eq.s32.totalorder %s17, 1
      %p186 = por %p184, %p185
      %p187 = scmp.ne.s32.totalorder %s179, %s182
      %p188 = scmp.eq.s32.totalorder %s17, 0
      %p189 = por %p187, %p188
      %p190 = scmp.ne.s32.totalorder %s179, %s182
      %p191 = scmp.eq.s32.totalorder %s22, 1
      %p192 = por %p190, %p191
      %p193 = scmp.ne.s32.totalorder %s182, %s183
      %p194 = scmp.eq.s32.totalorder %s22, 0
      %p195 = por %p193, %p194
      %p196 = scmp.ne.s32.totalorder %s182, %s183
      %p197 = scmp.eq.s32.totalorder %s23, 1
      %p198 = por %p196, %p197
      %p200 = scmp.ne.s32.totalorder %s183, %s199
      %p201 = scmp.eq.s32.totalorder %s23, 0
      %p202 = por %p200, %p201
      %p203 = scmp.le.s32.totalorder 1, %s17
      %p204 = scmp.lt.s32.totalorder %s17, 3
      %p205 = pnand %p203, %p204
      %p206 = pneg %p205
      // Predicated region
      $region9: #{tpu_custom_call.1} parent=5 // pred_check
        _
      $region10: #{tpu_custom_call.1} parent=5 // pred_check_branch
        %208 = sbr.rel (%p205) target = $region12
      $region11: #{tpu_custom_call.1} parent=5 // pred_region
        %s209 = ssub.s32 %s17, 1
        // Predicated region
        $region13: #{tpu_custom_call.1} parent=11 // pred_check
          %p210 = pneg %p64
        $region14: #{tpu_custom_call.1} parent=11 // pred_check_branch
          %212 = sbr.rel (%p210) target = $region16
        $region15: #{tpu_custom_call.1} parent=11 // pred_region
          _
        $region16: #{tpu_custom_call.1} parent=11 // pred_fallthru
          _
        // Predicated region
        $region17: #{tpu_custom_call.1} parent=11 // pred_check
          %p213 = pneg %p85
        $region18: #{tpu_custom_call.1} parent=11 // pred_check_branch
          %215 = sbr.rel (%p213) target = $region20
        $region19: #{tpu_custom_call.1} parent=11 // pred_region
          _
        $region20: #{tpu_custom_call.1} parent=11 // pred_fallthru
          _
        // Predicated region
        $region21: #{tpu_custom_call.1} parent=11 // pred_check
          %p216 = pneg %p106
        $region22: #{tpu_custom_call.1} parent=11 // pred_check_branch
          %218 = sbr.rel (%p216) target = $region24
        $region23: #{tpu_custom_call.1} parent=11 // pred_region
          _
        $region24: #{tpu_custom_call.1} parent=11 // pred_fallthru
          _
        // Predicated region
        $region25: #{tpu_custom_call.1} parent=11 // pred_check
          %p219 = pneg %p127
        $region26: #{tpu_custom_call.1} parent=11 // pred_check_branch
          %221 = sbr.rel (%p219) target = $region28
        $region27: #{tpu_custom_call.1} parent=11 // pred_region
          _
        $region28: #{tpu_custom_call.1} parent=11 // pred_fallthru
          _
        // Predicated region
        $region29: #{tpu_custom_call.1} parent=11 // pred_check
          %p222 = pneg %p148
        $region30: #{tpu_custom_call.1} parent=11 // pred_check_branch
          %224 = sbr.rel (%p222) target = $region32
        $region31: #{tpu_custom_call.1} parent=11 // pred_region
          _
        $region32: #{tpu_custom_call.1} parent=11 // pred_fallthru
          _
        // Predicated region
        $region33: #{tpu_custom_call.1} parent=11 // pred_check
          %p225 = pneg %p169
        $region34: #{tpu_custom_call.1} parent=11 // pred_check_branch
          %227 = sbr.rel (%p225) target = $region36
        $region35: #{tpu_custom_call.1} parent=11 // pred_region
          _
        $region36: #{tpu_custom_call.1} parent=11 // pred_fallthru
          _
      $region12: #{tpu_custom_call.1} parent=5 // pred_fallthru
        _
      %p228 = scmp.lt.s32.totalorder %s17, 2
      // Predicated region
      $region37: #{tpu_custom_call.1} parent=5 // pred_check
        %p229 = pneg %p228
      $region38: #{tpu_custom_call.1} parent=5 // pred_check_branch
        %231 = sbr.rel (%p229) target = $region40
      $region39: #{tpu_custom_call.1} parent=5 // pred_region
        // Predicated region
        $region41: #{tpu_custom_call.1} parent=39 // pred_check
          %p232 = pneg %p37
        $region42: #{tpu_custom_call.1} parent=39 // pred_check_branch
          %234 = sbr.rel (%p232) target = $region44
        $region43: #{tpu_custom_call.1} parent=39 // pred_region
          %s235 = smul.u32 48, %s17
          %s236 = ssub.s32 88, %s235
          %p237 = scmp.lt.s32.totalorder %s236, 48
          %s238 = scalar_select %p237, %s236, 48
          %s239 = smul.u32 8, %s238
          %p240 = scmp.lt.s32.totalorder %s235, 87
          %s241 = scalar_select %p240, %s235, 87
          %s242 = smul.addr %s241, 8
          %s243 = scalar_lea.vmem %s0, %s242
          %s244 = smul.u32 48, %s17
          %s245 = ssub.s32 88, %s244
          %p246 = scmp.lt.s32.totalorder %s245, 48
          %s247 = scalar_select %p246, %s245, 48
          %s248 = smul.u32 8, %s247
        $region44: #{tpu_custom_call.1} parent=39 // pred_fallthru
          _
      $region40: #{tpu_custom_call.1} parent=5 // pred_fallthru
        _
      %p249 = scmp.le.s32.totalorder 1, %s17
      %p250 = scmp.lt.s32.totalorder %s17, 3
      %p251 = pnand %p249, %p250
      %p252 = pneg %p251
      // Predicated region
      $region45: #{tpu_custom_call.1} parent=5 // pred_check
        _
      $region46: #{tpu_custom_call.1} parent=5 // pred_check_branch
        %254 = sbr.rel (%p251) target = $region48
      $region47: #{tpu_custom_call.1} parent=5 // pred_region
        %s255 = ssub.s32 %s17, 1
        %s256 = smul.u32 48, %s22
        %s257 = ssub.s32 88, %s256
        %p258 = scmp.lt.s32.totalorder %s257, 48
        %s259 = scalar_select %p258, %s257, 48
        %s260 = smul.u32 8, %s259
        %p261 = scmp.lt.s32.totalorder %s256, 87
        %s262 = scalar_select %p261, %s256, 87
        %s263 = smul.addr %s262, 8
        %s264 = scalar_lea.vmem %s0, %s263
        %p265 = pneg %p43
        %p266 = pneg %p40
        %p267 = pneg %p64
        %p268 = pneg %p61
        %p269 = pneg %p85
        %p270 = pneg %p82
        %p271 = pneg %p106
        %p272 = pneg %p103
        %p273 = pneg %p127
        %p274 = pneg %p124
        %p275 = pneg %p148
        %p276 = pneg %p145
        %p277 = pneg %p169
        %p278 = pneg %p166
        %p279 = pneg %p195
        %p280 = pneg %p192
        %s281 = sand.u32 %s182, 1
        %s282 = scalar_lea.sflag [#allocation4], %s281
        %s283 = sand.u32 %s182, 1
        %s284 = smul.addr %s283, 3
        %s285 = scalar_lea.vmem [#allocation3], %s284
        %s286 = smul.u32 48, %s22
        %s287 = ssub.s32 88, %s286
        %p288 = scmp.lt.s32.totalorder %s287, 48
        %s289 = scalar_select %p288, %s287, 48
        %s290 = smul.u32 8, %s289
        %p291 = scmp.lt.s32.totalorder %s286, 87
        %s292 = scalar_select %p291, %s286, 87
        %s293 = smul.addr %s292, 8
        %s294 = scalar_lea.vmem %s0, %s293
        %s295 = smul.u32 48, %s22
        %s296 = ssub.s32 88, %s295
        %p297 = scmp.lt.s32.totalorder %s296, 48
        %s298 = scalar_select %p297, %s296, 48
        %s299 = smul.u32 8, %s298
        %s300 = smul.u32 3, %s22
        %v302 = vld [vmem:[%s294] sm:$0xff]
        %v303 = vld [vmem:[%s294 + $0x8] sm:$0xff]
        %v304 = vld [vmem:[%s294 + $0x10] sm:$0xff]
        %v305 = vld [vmem:[%s294 + $0x18] sm:$0xff]
        %v306 = vld [vmem:[%s294 + $0x20] sm:$0xff]
        %v307 = vld [vmem:[%s294 + $0x28] sm:$0xff]
        %v308 = vld [vmem:[%s294 + $0x30] sm:$0xff]
        %v309 = vld [vmem:[%s294 + $0x38] sm:$0xff]
        %v310 = vld [vmem:[%s294 + $0x40] sm:$0xff]
        %v311 = vld [vmem:[%s294 + $0x48] sm:$0xff]
        %v312 = vld [vmem:[%s294 + $0x50] sm:$0xff]
        %v313 = vld [vmem:[%s294 + $0x58] sm:$0xff]
        %v314 = vld [vmem:[%s294 + $0x60] sm:$0xff]
        %v315 = vld [vmem:[%s294 + $0x68] sm:$0xff]
        %v316 = vld [vmem:[%s294 + $0x70] sm:$0xff]
        %v317 = vld [vmem:[%s294 + $0x78] sm:$0xff]
        %v318 = vld [vmem:[%s294 + $0x80] sm:$0xff]
        %v319 = vld [vmem:[%s294 + $0x88] sm:$0xff]
        %v320 = vld [vmem:[%s294 + $0x90] sm:$0xff]
        %v321 = vld [vmem:[%s294 + $0x98] sm:$0xff]
        %v322 = vld [vmem:[%s294 + $0xa0] sm:$0xff]
        %v323 = vld [vmem:[%s294 + $0xa8] sm:$0xff]
        %v324 = vld [vmem:[%s294 + $0xb0] sm:$0xff]
        %v325 = vld [vmem:[%s294 + $0xb8] sm:$0xff]
        %v326 = vld [vmem:[%s294 + $0xc0] sm:$0xff]
        %v327 = vld [vmem:[%s294 + $0xc8] sm:$0xff]
        %v328 = vld [vmem:[%s294 + $0xd0] sm:$0xff]
        %v329 = vld [vmem:[%s294 + $0xd8] sm:$0xff]
        %v330 = vld [vmem:[%s294 + $0xe0] sm:$0xff]
        %v331 = vld [vmem:[%s294 + $0xe8] sm:$0xff]
        %v332 = vld [vmem:[%s294 + $0xf0] sm:$0xff]
        %v333 = vld [vmem:[%s294 + $0xf8] sm:$0xff]
        %v334 = vld [vmem:[%s294 + $0x100] sm:$0xff]
        %v335 = vld [vmem:[%s294 + $0x108] sm:$0xff]
        %v336 = vld [vmem:[%s294 + $0x110] sm:$0xff]
        %v337 = vld [vmem:[%s294 + $0x118] sm:$0xff]
        %v338 = vld [vmem:[%s294 + $0x120] sm:$0xff]
        %v339 = vld [vmem:[%s294 + $0x128] sm:$0xff]
        %v340 = vld [vmem:[%s294 + $0x130] sm:$0xff]
        %v341 = vld [vmem:[%s294 + $0x138] sm:$0xff]
        %v342 = vld [vmem:[%s294 + $0x140] sm:$0xff]
        %v343 = vld [vmem:[%s294 + $0x148] sm:$0xff]
        %v344 = vld [vmem:[%s294 + $0x150] sm:$0xff]
        %v345 = vld [vmem:[%s294 + $0x158] sm:$0xff]
        %v346 = vld [vmem:[%s294 + $0x160] sm:$0xff]
        %v347 = vld [vmem:[%s294 + $0x168] sm:$0xff]
        %v348 = vld [vmem:[%s294 + $0x170] sm:$0xff]
        %v349 = vld [vmem:[%s294 + $0x178] sm:$0xff]
        %v350 = vpack.c.bf16 %v303, %v302
        %v351 = vpack.c.bf16 %v305, %v304
        %v352 = vpack.c.bf16 %v307, %v306
        %v353 = vpack.c.bf16 %v309, %v308
        %v354 = vpack.c.bf16 %v311, %v310
        %v355 = vpack.c.bf16 %v313, %v312
        %v356 = vpack.c.bf16 %v315, %v314
        %v357 = vpack.c.bf16 %v317, %v316
        %v358 = vpack.c.bf16 %v319, %v318
        %v359 = vpack.c.bf16 %v321, %v320
        %v360 = vpack.c.bf16 %v323, %v322
        %v361 = vpack.c.bf16 %v325, %v324
        %v362 = vpack.c.bf16 %v327, %v326
        %v363 = vpack.c.bf16 %v329, %v328
        %v364 = vpack.c.bf16 %v331, %v330
        %v365 = vpack.c.bf16 %v333, %v332
        %v366 = vpack.c.bf16 %v335, %v334
        %v367 = vpack.c.bf16 %v337, %v336
        %v368 = vpack.c.bf16 %v339, %v338
        %v369 = vpack.c.bf16 %v341, %v340
        %v370 = vpack.c.bf16 %v343, %v342
        %v371 = vpack.c.bf16 %v345, %v344
        %v372 = vpack.c.bf16 %v347, %v346
        %v373 = vpack.c.bf16 %v349, %v348
        %v374 = vld [vmem:[%s1] sm:$0xf]
        %v375 = vld [vmem:[%s1 + $0x4] sm:$0xf]
        %v376 = vld [vmem:[%s1 + $0x8] sm:$0xf]
        %v377 = vld [vmem:[%s1 + $0xc] sm:$0xf]
        %v378 = vld [vmem:[%s1 + $0x10] sm:$0xf]
        %v379 = vld [vmem:[%s1 + $0x14] sm:$0xf]
        %v380 = vld [vmem:[%s1 + $0x18] sm:$0xf]
        %v381 = vld [vmem:[%s1 + $0x1c] sm:$0xf]
        %v382 = vld [vmem:[%s1 + $0x20] sm:$0xf]
        %v383 = vld [vmem:[%s1 + $0x24] sm:$0xf]
        %v384 = vld [vmem:[%s2] sm:$0xff]
        %v385 = vld [vmem:[%s2 + $0x8] sm:$0xff]
        %v386 = vld [vmem:[%s2 + $0x10] sm:$0xff]
        %v387 = vld [vmem:[%s2 + $0x18] sm:$0xff]
        %v388 = vld [vmem:[%s2 + $0x20] sm:$0xff]
        %v389 = vld [vmem:[%s2 + $0x28] sm:$0xff]
        %v390 = vld [vmem:[%s2 + $0x30] sm:$0xff]
        %v391 = vld [vmem:[%s2 + $0x38] sm:$0xff]
        %v392 = vld [vmem:[%s2 + $0x40] sm:$0xff]
        %v393 = vld [vmem:[%s2 + $0x48] sm:$0xff]
        %395 = vset.pattern.permute.xlu0 0
        %396 = vperm.xlu0 %395, %v384
        %v397 = vpop.permute.xlu0 %396
        %400 = vset.pattern.permute.xlu0 0
        %401 = vperm.xlu0 %400, %v385
        %v402 = vpop.permute.xlu0 %401
        %405 = vset.pattern.permute.xlu0 0
        %406 = vperm.xlu0 %405, %v386
        %v407 = vpop.permute.xlu0 %406
        %410 = vset.pattern.permute.xlu0 0
        %411 = vperm.xlu0 %410, %v387
        %v412 = vpop.permute.xlu0 %411
        %415 = vset.pattern.permute.xlu0 0
        %416 = vperm.xlu0 %415, %v388
        %v417 = vpop.permute.xlu0 %416
        %420 = vset.pattern.permute.xlu0 0
        %421 = vperm.xlu0 %420, %v389
        %v422 = vpop.permute.xlu0 %421
        %425 = vset.pattern.permute.xlu0 0
        %426 = vperm.xlu0 %425, %v390
        %v427 = vpop.permute.xlu0 %426
        %430 = vset.pattern.permute.xlu0 0
        %431 = vperm.xlu0 %430, %v391
        %v432 = vpop.permute.xlu0 %431
        %435 = vset.pattern.permute.xlu0 0
        %436 = vperm.xlu0 %435, %v392
        %v437 = vpop.permute.xlu0 %436
        %440 = vset.pattern.permute.xlu0 0
        %441 = vperm.xlu0 %440, %v393
        %v442 = vpop.permute.xlu0 %441
        %v454 = vunpack.c.l.b16 %v374
        %v455 = vunpack.c.l.b16 %v375
        %v456 = vunpack.c.l.b16 %v376
        %v457 = vunpack.c.l.b16 %v377
        %v458 = vunpack.c.l.b16 %v378
        %v459 = vunpack.c.l.b16 %v379
        %v460 = vunpack.c.l.b16 %v380
        %v461 = vunpack.c.l.b16 %v381
        %v462 = vunpack.c.l.b16 %v382
        %v463 = vunpack.c.l.b16 %v383
        %v464 = vpack.c.b16 %v455, %v454
        %v465 = vpack.c.b16 %v457, %v456
        %v466 = vpack.c.b16 %v459, %v458
        %v467 = vpack.c.b16 %v461, %v460
        %v468 = vpack.c.b16 %v463, %v462
        %vm469 = vcmask 261120
        %v471 = vsel %vm469, %v464, 0
        %v474 = vsel %vm469, %v465, 0
        %v477 = vsel %vm469, %v466, 0
        %v480 = vsel %vm469, %v467, 0
        %v483 = vsel %vm469, %v468, 0
        %v486 = vsel %vm469, %v350, 0
        %v489 = vsel %vm469, %v351, 0
        %v492 = vsel %vm469, %v352, 0
        %v495 = vsel %vm469, %v353, 0
        %v498 = vsel %vm469, %v354, 0
        %v501 = vsel %vm469, %v355, 0
        %v504 = vsel %vm469, %v356, 0
        %v507 = vsel %vm469, %v357, 0
        %v510 = vsel %vm469, %v358, 0
        %v513 = vsel %vm469, %v359, 0
        %v516 = vsel %vm469, %v360, 0
        %v519 = vsel %vm469, %v361, 0
        %v522 = vsel %vm469, %v362, 0
        %v525 = vsel %vm469, %v363, 0
        %v528 = vsel %vm469, %v364, 0
        %v531 = vsel %vm469, %v365, 0
        %v534 = vsel %vm469, %v366, 0
        %v537 = vsel %vm469, %v367, 0
        %v540 = vsel %vm469, %v368, 0
        %v543 = vsel %vm469, %v369, 0
        %v546 = vsel %vm469, %v370, 0
        %v549 = vsel %vm469, %v371, 0
        %v552 = vsel %vm469, %v372, 0
        %v555 = vsel %vm469, %v373, 0
        %557 = vmatpush.bf16.xpose.msra.mxu0 %v507
        %558 = vmatpush.bf16.xpose.msra.mxu0 %v504
        %559 = vmatpush.bf16.xpose.msra.mxu0 %v501
        %560 = vmatpush.bf16.xpose.msra.mxu0 %v498
        %561 = vmatpush.bf16.xpose.msra.mxu0 %v495
        %562 = vmatpush.bf16.xpose.msra.mxu0 %v492
        %563 = vmatpush.bf16.xpose.msra.mxu0 %v489
        %564 = vmatpush.bf16.xpose.msra.mxu0 %v486
        %565 = vmatmul.bf16.gmra.mxu0 %v471
        %v566 = vpop.f32.mrf.mxu0
        %v567 = vadd.f32 %v397, %v566
        %v568 = vpop.f32.mrf.mxu0
        %v569 = vadd.f32 %v402, %v568
        %570 = vmatmul.bf16.gmra.mxu0 %v474
        %v571 = vpop.f32.mrf.mxu0
        %v572 = vadd.f32 %v407, %v571
        %v573 = vpop.f32.mrf.mxu0
        %v574 = vadd.f32 %v412, %v573
        %575 = vmatmul.bf16.gmra.mxu0 %v477
        %v576 = vpop.f32.mrf.mxu0
        %v577 = vadd.f32 %v417, %v576
        %v578 = vpop.f32.mrf.mxu0
        %v579 = vadd.f32 %v422, %v578
        %580 = vmatmul.bf16.gmra.mxu0 %v480
        %v581 = vpop.f32.mrf.mxu0
        %v582 = vadd.f32 %v427, %v581
        %v583 = vpop.f32.mrf.mxu0
        %v584 = vadd.f32 %v432, %v583
        %585 = vmatmul.bf16.gmra.mxu0 %v483
        %v586 = vpop.f32.mrf.mxu0
        %v587 = vadd.f32 %v437, %v586
        %v588 = vpop.f32.mrf.mxu0
        %v589 = vadd.f32 %v442, %v588
        %590 = vdwg.mxu0
        %591 = vmatpush.bf16.xpose.msra.mxu0 %v531
        %592 = vmatpush.bf16.xpose.msra.mxu0 %v528
        %593 = vmatpush.bf16.xpose.msra.mxu0 %v525
        %594 = vmatpush.bf16.xpose.msra.mxu0 %v522
        %595 = vmatpush.bf16.xpose.msra.mxu0 %v519
        %596 = vmatpush.bf16.xpose.msra.mxu0 %v516
        %597 = vmatpush.bf16.xpose.msra.mxu0 %v513
        %598 = vmatpush.bf16.xpose.msra.mxu0 %v510
        %599 = vmatmul.bf16.gmra.mxu0 %v471
        %v600 = vpop.f32.mrf.mxu0
        %v601 = vadd.f32 %v397, %v600
        %v602 = vpop.f32.mrf.mxu0
        %v603 = vadd.f32 %v402, %v602
        %604 = vmatmul.bf16.gmra.mxu0 %v474
        %v605 = vpop.f32.mrf.mxu0
        %v606 = vadd.f32 %v407, %v605
        %v607 = vpop.f32.mrf.mxu0
        %v608 = vadd.f32 %v412, %v607
        %609 = vmatmul.bf16.gmra.mxu0 %v477
        %v610 = vpop.f32.mrf.mxu0
        %v611 = vadd.f32 %v417, %v610
        %v612 = vpop.f32.mrf.mxu0
        %v613 = vadd.f32 %v422, %v612
        %614 = vmatmul.bf16.gmra.mxu0 %v480
        %v615 = vpop.f32.mrf.mxu0
        %v616 = vadd.f32 %v427, %v615
        %v617 = vpop.f32.mrf.mxu0
        %v618 = vadd.f32 %v432, %v617
        %619 = vmatmul.bf16.gmra.mxu0 %v483
        %v620 = vpop.f32.mrf.mxu0
        %v621 = vadd.f32 %v437, %v620
        %v622 = vpop.f32.mrf.mxu0
        %v623 = vadd.f32 %v442, %v622
        %624 = vdwg.mxu0
        %625 = vmatpush.bf16.xpose.msra.mxu0 %v555
        %626 = vmatpush.bf16.xpose.msra.mxu0 %v552
        %627 = vmatpush.bf16.xpose.msra.mxu0 %v549
        %628 = vmatpush.bf16.xpose.msra.mxu0 %v546
        %629 = vmatpush.bf16.xpose.msra.mxu0 %v543
        %630 = vmatpush.bf16.xpose.msra.mxu0 %v540
        %631 = vmatpush.bf16.xpose.msra.mxu0 %v537
        %632 = vmatpush.bf16.xpose.msra.mxu0 %v534
        %633 = vmatmul.bf16.gmra.mxu0 %v471
        %v634 = vpop.f32.mrf.mxu0
        %v635 = vadd.f32 %v397, %v634
        %v636 = vpop.f32.mrf.mxu0
        %v637 = vadd.f32 %v402, %v636
        %638 = vmatmul.bf16.gmra.mxu0 %v474
        %v639 = vpop.f32.mrf.mxu0
        %v640 = vadd.f32 %v407, %v639
        %v641 = vpop.f32.mrf.mxu0
        %v642 = vadd.f32 %v412, %v641
        %643 = vmatmul.bf16.gmra.mxu0 %v477
        %v644 = vpop.f32.mrf.mxu0
        %v645 = vadd.f32 %v417, %v644
        %v646 = vpop.f32.mrf.mxu0
        %v647 = vadd.f32 %v422, %v646
        %648 = vmatmul.bf16.gmra.mxu0 %v480
        %v649 = vpop.f32.mrf.mxu0
        %v650 = vadd.f32 %v427, %v649
        %v651 = vpop.f32.mrf.mxu0
        %v652 = vadd.f32 %v432, %v651
        %653 = vmatmul.bf16.gmra.mxu0 %v483
        %v654 = vpop.f32.mrf.mxu0
        %v655 = vadd.f32 %v437, %v654
        %v656 = vpop.f32.mrf.mxu0
        %v657 = vadd.f32 %v442, %v656
        %658 = vdwg.mxu0
        %v659 = vmax.f32 %v567, 0.0
        %v660 = vmax.f32 %v601, 0.0
        %v661 = vmax.f32 %v635, 0.0
        %v662 = vmax.f32 %v569, 0.0
        %v663 = vmax.f32 %v603, 0.0
        %v664 = vmax.f32 %v637, 0.0
        %v665 = vmax.f32 %v572, 0.0
        %v666 = vmax.f32 %v606, 0.0
        %v667 = vmax.f32 %v640, 0.0
        %v668 = vmax.f32 %v574, 0.0
        %v669 = vmax.f32 %v608, 0.0
        %v670 = vmax.f32 %v642, 0.0
        %v671 = vmax.f32 %v577, 0.0
        %v672 = vmax.f32 %v611, 0.0
        %v673 = vmax.f32 %v645, 0.0
        %v674 = vmax.f32 %v579, 0.0
        %v675 = vmax.f32 %v613, 0.0
        %v676 = vmax.f32 %v647, 0.0
        %v677 = vmax.f32 %v582, 0.0
        %v678 = vmax.f32 %v616, 0.0
        %v679 = vmax.f32 %v650, 0.0
        %v680 = vmax.f32 %v584, 0.0
        %v681 = vmax.f32 %v618, 0.0
        %v682 = vmax.f32 %v652, 0.0
        %v683 = vmax.f32 %v587, 0.0
        %v684 = vmax.f32 %v621, 0.0
        %v685 = vmax.f32 %v655, 0.0
        %v686 = vmax.f32 %v589, 0.0
        %v687 = vmax.f32 %v623, 0.0
        %v688 = vmax.f32 %v657, 0.0
        %v689 = vld [vmem:[%s3] sm:$0xf]
        %v690 = vld [vmem:[%s3 + $0x4] sm:$0x1]
        %v691 = vpack.c.bf16 %v662, %v659
        %v692 = vpack.c.bf16 %v663, %v660
        %v693 = vpack.c.bf16 %v664, %v661
        %v694 = vpack.c.bf16 %v668, %v665
        %v695 = vpack.c.bf16 %v669, %v666
        %v696 = vpack.c.bf16 %v670, %v667
        %v697 = vpack.c.bf16 %v674, %v671
        %v698 = vpack.c.bf16 %v675, %v672
        %v699 = vpack.c.bf16 %v676, %v673
        %v700 = vpack.c.bf16 %v680, %v677
        %v701 = vpack.c.bf16 %v681, %v678
        %v702 = vpack.c.bf16 %v682, %v679
        %v703 = vpack.c.bf16 %v686, %v683
        %v704 = vpack.c.bf16 %v687, %v684
        %v705 = vpack.c.bf16 %v688, %v685
        %v706 = vld [vmem:[%s4] sm:$0xff]
        %v707 = vld [vmem:[%s4 + $0x8] sm:$0x3]
        %709 = vset.pattern.permute.xlu0 0
        %710 = vperm.xlu0 %709, %v706
        %v711 = vpop.permute.xlu0 %710
        %714 = vset.pattern.permute.xlu0 0
        %715 = vperm.xlu0 %714, %v707
        %v716 = vpop.permute.xlu0 %715
        %v720 = vunpack.c.l.b16 %v689
        %v721 = vunpack.c.l.b16 %v690
        %v722 = vpack.c.b16 %v721, %v720
        %vm723 = vcmask 654336
        %v725 = vsel %vm723, %v722, 0
        %727 = vmatpush.bf16.msra.mxu0 0
        %728 = vmatpush.bf16.msra.mxu0 0
        %729 = vmatpush.bf16.msra.mxu0 0
        %730 = vmatpush.bf16.msra.mxu0 %v703
        %731 = vmatpush.bf16.msra.mxu0 %v700
        %732 = vmatpush.bf16.msra.mxu0 %v697
        %733 = vmatpush.bf16.msra.mxu0 %v694
        %734 = vmatpush.bf16.msra.mxu0 %v691
        %735 = vmatmul.bf16.gmra.mxu0 %v725
        %v736 = vpop.f32.mrf.mxu0
        %v737 = vadd.f32 %v711, %v736
        %v738 = vpop.f32.mrf.mxu0
        %v739 = vadd.f32 %v716, %v738
        %740 = vdwg.mxu0
        %741 = vmatpush.bf16.msra.mxu0 0
        %742 = vmatpush.bf16.msra.mxu0 0
        %743 = vmatpush.bf16.msra.mxu0 0
        %744 = vmatpush.bf16.msra.mxu0 %v704
        %745 = vmatpush.bf16.msra.mxu0 %v701
        %746 = vmatpush.bf16.msra.mxu0 %v698
        %747 = vmatpush.bf16.msra.mxu0 %v695
        %748 = vmatpush.bf16.msra.mxu0 %v692
        %749 = vmatmul.bf16.gmra.mxu0 %v725
        %v750 = vpop.f32.mrf.mxu0
        %v751 = vadd.f32 %v711, %v750
        %v752 = vpop.f32.mrf.mxu0
        %v753 = vadd.f32 %v716, %v752
        %754 = vdwg.mxu0
        %755 = vmatpush.bf16.msra.mxu0 0
        %756 = vmatpush.bf16.msra.mxu0 0
        %757 = vmatpush.bf16.msra.mxu0 0
        %758 = vmatpush.bf16.msra.mxu0 %v705
        %759 = vmatpush.bf16.msra.mxu0 %v702
        %760 = vmatpush.bf16.msra.mxu0 %v699
        %761 = vmatpush.bf16.msra.mxu0 %v696
        %762 = vmatpush.bf16.msra.mxu0 %v693
        %763 = vmatmul.bf16.gmra.mxu0 %v725
        %v764 = vpop.f32.mrf.mxu0
        %v765 = vadd.f32 %v711, %v764
        %v766 = vpop.f32.mrf.mxu0
        %v767 = vadd.f32 %v716, %v766
        %768 = vdwg.mxu0
        %v769 = vmax.f32 %v737, 0.0
        %v770 = vmax.f32 %v751, 0.0
        %v771 = vmax.f32 %v765, 0.0
        %v772 = vmax.f32 %v739, 0.0
        %v773 = vmax.f32 %v753, 0.0
        %v774 = vmax.f32 %v767, 0.0
        %v775 = vld [vmem:[%s5] sm:$0xff]
        %v776 = vld [vmem:[%s5 + $0x8] sm:$0x3]
        %778 = vset.pattern.permute.xlu0 0
        %779 = vperm.xlu0 %778, %v775
        %v780 = vpop.permute.xlu0 %779
        %783 = vset.pattern.permute.xlu0 0
        %784 = vperm.xlu0 %783, %v776
        %v785 = vpop.permute.xlu0 %784
        %v787 = vmul.f32 %v769, %v780
        %v788 = vmul.f32 %v770, %v780
        %v789 = vmul.f32 %v771, %v780
        %v790 = vmul.f32 %v772, %v785
        %v791 = vmul.f32 %v773, %v785
        %v792 = vmul.f32 %v774, %v785
        %vm793 = vcmask 1041408
        %v794 = vsel %vm793, %v790, 0.0
        %v795 = vadd.f32 %v787, %v794
        %v796 = vrot.slane %v795, 4
        %v797 = vadd.f32 %v795, %v796
        %v798 = vrot.slane %v797, 2
        %v799 = vadd.f32 %v797, %v798
        %v800 = vrot.slane %v799, 1
        %v801 = vadd.f32 %v799, %v800
        %v802 = vsel %vm793, %v791, 0.0
        %v803 = vadd.f32 %v788, %v802
        %v804 = vrot.slane %v803, 4
        %v805 = vadd.f32 %v803, %v804
        %v806 = vrot.slane %v805, 2
        %v807 = vadd.f32 %v805, %v806
        %v808 = vrot.slane %v807, 1
        %v809 = vadd.f32 %v807, %v808
        %v810 = vsel %vm793, %v792, 0.0
        %v811 = vadd.f32 %v789, %v810
        %v812 = vrot.slane %v811, 4
        %v813 = vadd.f32 %v811, %v812
        %v814 = vrot.slane %v813, 2
        %v815 = vadd.f32 %v813, %v814
        %v816 = vrot.slane %v815, 1
        %v817 = vadd.f32 %v815, %v816
        %s818 = sld [smem:[#allocation2]]
        %v819 = vstv %s818
        %v820 = vadd.f32 %v801, %v819
        %v821 = vadd.f32 %v809, %v819
        %v822 = vadd.f32 %v817, %v819
        %v826 = vrot.slane %v821, 7
        %v827 = vrot.slane %v822, 6
        %vm828 = vcmask 1040384
        %v829 = vsel %vm828, %v820, %v826
        %v830 = vsel %vm793, %v829, %v827
        %v832 = vlaneseq
        %vm833 = vcmp.ge.s32.totalorder %v832, 0
        %vm834 = vcmp.lt.s32.totalorder %v832, 384
        %vm835 = vmand %vm833, %vm834
        %836 = vst.msk [vmem:[%s285] sm:$0x7] %vm835, %v830
        %s837 = sand.u32 %s182, 1
        %s838 = scalar_lea.sflag [#allocation4], %s837
        %s839 = sand.u32 %s182, 1
        %s840 = smul.addr %s839, 3
        %s841 = scalar_lea.vmem [#allocation3], %s840
        // Predicated region
        $region49: #{tpu_custom_call.1} parent=47 // pred_check
          %p842 = pneg %p192
        $region50: #{tpu_custom_call.1} parent=47 // pred_check_branch
          %844 = sbr.rel (%p842) target = $region52
        $region51: #{tpu_custom_call.1} parent=47 // pred_region
          %s845 = smul.u32 3, %s22
          %847 = vsyncadd %s838, 0
          %s848 = scalar_lea.hbm %s7, %s845
          %s850 = sshll.u32 %s841, 4
          %s851 = int_to_ptr.vmem [resolvable:$true] %s850
          %s852 = sshll.u32 %s848, 4
          %s853 = int_to_ptr.hbm [resolvable:$true] %s852
          %855 = dma.vmem_to_hbm [thread:$0]  %s851, 48, %s853, %s838
        $region52: #{tpu_custom_call.1} parent=47 // pred_fallthru
          _
      $region48: #{tpu_custom_call.1} parent=5 // pred_fallthru
        _
      %p856 = scmp.le.s32.totalorder 2, %s17
      // Predicated region
      $region53: #{tpu_custom_call.1} parent=5 // pred_check
        %p857 = pneg %p856
      $region54: #{tpu_custom_call.1} parent=5 // pred_check_branch
        %859 = sbr.rel (%p857) target = $region56
      $region55: #{tpu_custom_call.1} parent=5 // pred_region
        %s860 = ssub.s32 %s17, 2
        // Predicated region
        $region57: #{tpu_custom_call.1} parent=55 // pred_check
          %p861 = pneg %p198
        $region58: #{tpu_custom_call.1} parent=55 // pred_check_branch
          %863 = sbr.rel (%p861) target = $region60
        $region59: #{tpu_custom_call.1} parent=55 // pred_region
          %s864 = sand.u32 %s183, 1
          %s865 = scalar_lea.sflag [#allocation4], %s864
          %s866 = sand.u32 %s183, 1
          %s867 = smul.addr %s866, 3
          %s868 = scalar_lea.vmem [#allocation3], %s867
          %870 = dma.done %s865, 48
        $region60: #{tpu_custom_call.1} parent=55 // pred_fallthru
          _
      $region56: #{tpu_custom_call.1} parent=5 // pred_fallthru
        _
    $region6: #{tpu_custom_call.1} parent=1 // loop_footer
      %s21 = sadd.s32 1, %s17
    $region7: #{tpu_custom_call.1} parent=1 // loop_footer_branch
      %16 = sbr.rel target = $region3
    $region8: #{tpu_custom_call.1} parent=1 // loop_exit
      _
    %871 = vsyncpa [#allocation4], 1
    %s872 = scalar_lea.sflag [#allocation4], 1
    %873 = vsyncpa %s872, 1

</llo_original>
